<compile_context>
chip_gen: v5e
topology: v5e:2x2
jax: 0.10.0
libtpu: 0.0.40
codegen_flags: <defaults>
</compile_context>

<pallas_src>
import jax
import jax.numpy as jnp
from jax.scipy.linalg import block_diag
from jax.experimental import pallas as pl
from jax.experimental.pallas import tpu as pltpu

IN_DIM = 8
OUT_DIM = 8
PACK = 128 // IN_DIM          # 16 samples per packed 128-lane row
HP = jax.lax.Precision.HIGHEST


def mlp_kernel(x_ref, w1_ref, b1_ref, w2_ref, b2_ref, w3_ref, b3_ref, o_ref):
    # x_ref: [tile_r, 128] = 16 packed samples per row, batch on sublanes, lane-dense.
    x = x_ref[...]
    h1 = jnp.tanh(
        jnp.dot(x, w1_ref[...], precision=HP, preferred_element_type=jnp.float32)
        + b1_ref[...]
    )                                                           # [tile_r, 64]
    h2 = jnp.tanh(
        jnp.dot(h1, w2_ref[...], precision=HP, preferred_element_type=jnp.float32)
        + b2_ref[...]
    )                                                           # [tile_r, 64]
    y = (
        jnp.dot(h2, w3_ref[...], precision=HP, preferred_element_type=jnp.float32)
        + b3_ref[...]
    )                                                           # [tile_r, 128]
    o_ref[...] = y.astype(o_ref.dtype)                          # unmasked lane-dense store


def _pick_tile_rows(rows, cap=4096):
    """rows is a multiple of 8.  Largest multiple-of-8 divisor of rows that is <= cap
    (cap=4096 rows == 65536 samples ~= 4 MiB streamed/step), preferring an even number
    of grid steps so both v7x TensorCores get work.  Raise cap together with
    vmem_limit_bytes for even larger steps on v7x."""
    divisors = [t for t in range(8, min(rows, cap) + 1, 8) if rows % t == 0]
    even = [t for t in divisors if (rows // t) % 2 == 0]
    if even:
        return max(even)
    if divisors:
        return max(divisors)
    return rows


def pack_params(p, copies=PACK):
    """Build the block-diagonal weights / lane-tiled biases once (hoisted out of the
    forward pass).  p holds PyTorch-orientation weights [out,in] and biases [out]."""
    def bd(w):                       # [out, in] -> block_diag of 16 copies of w.T
        return block_diag(*([w.T] * copies))
    def bt(b):                       # [out] -> [1, 16*out], broadcasts over sublanes
        return jnp.tile(b, copies)[None, :]
    return {
        "w1": bd(p["w1"]), "b1": bt(p["b1"]),
        "w2": bd(p["w2"]), "b2": bt(p["b2"]),
        "w3": bd(p["w3"]), "b3": bt(p["b3"]),
    }


def mlp_forward(x, bdp, *, tile_rows=None):
    """x: [B, 8] float32.  bdp: packed params from pack_params()."""
    B, in_dim = x.shape
    assert in_dim == IN_DIM and IN_DIM == OUT_DIM

    # Pad batch to a multiple of 128 so packed rows are a multiple of 8 (layout rule)
    # and the output store stays unmasked; sliced back at the end.
    pad = (-B) % (PACK * 8)
    Bp = B + pad
    if pad:
        x = jnp.pad(x, ((0, pad), (0, 0)))

    rows = Bp // PACK
    lane_in = PACK * IN_DIM      # 128
    lane_out = PACK * OUT_DIM    # 128
    xp = x.reshape(rows, lane_in)            # free, layout-preserving reshape

    if tile_rows is None:
        tile_rows = _pick_tile_rows(rows)
    assert rows % tile_rows == 0 and (tile_rows % 8 == 0 or tile_rows == rows)
    grid = (rows // tile_rows,)

    h1p = bdp["w1"].shape[1]                 # 64
    h2p = bdp["w2"].shape[1]                 # 64

    # Small resident arrays: untiled, copied into VMEM once (no per-step DMA).
    resident = pl.BlockSpec(memory_space=pltpu.MemorySpace.VMEM)

    w_bytes = sum(int(bdp[k].size) * 4 for k in ("w1", "w2", "w3", "b1", "b2", "b3"))
    cost = pl.CostEstimate(
        flops=2 * rows * (lane_in * h1p + h1p * h2p + h2p * lane_out),
        transcendentals=rows * (h1p + h2p),
        bytes_accessed=4 * rows * (lane_in + lane_out) + w_bytes,
    )

    yp = pl.pallas_call(
        mlp_kernel,
        out_shape=jax.ShapeDtypeStruct((rows, lane_out), x.dtype),
        grid_spec=pltpu.PrefetchScalarGridSpec(
            num_scalar_prefetch=0,
            grid=grid,
            in_specs=[
                pl.BlockSpec((tile_rows, lane_in), lambda i: (i, 0)),   # packed x tile
                resident,  # w1 block-diag [128, 64]
                resident,  # b1 [1, 64]
                resident,  # w2 block-diag [64, 64]
                resident,  # b2 [1, 64]
                resident,  # w3 block-diag [64, 128]
                resident,  # b3 [1, 128]
            ],
            out_specs=pl.BlockSpec((tile_rows, lane_out), lambda i: (i, 0)),
        ),
        compiler_params=pltpu.CompilerParams(
            dimension_semantics=("parallel",),        # batch rows shard across TCs
            vmem_limit_bytes=32 * 1024 * 1024,        # > v5e's 16 MiB default scoped limit
        ),
        cost_estimate=cost,
    )(xp, bdp["w1"], bdp["b1"], bdp["w2"], bdp["b2"], bdp["w3"], bdp["b3"])

    y = yp.reshape(Bp, OUT_DIM)              # free reshape back to [B_pad, 8]
    return y[:B] if pad else y


def init_params(key, in_dim=IN_DIM, h1=4, h2=4, out_dim=OUT_DIM):
    """PyTorch nn.Linear-style init: U(-1/sqrt(fan_in), +1/sqrt(fan_in)).
    Weights kept in PyTorch orientation [out_features, in_features], biases [out]."""
    ks = jax.random.split(key, 6)

    def linear(kw, kb, fan_in, fan_out):
        bound = 1.0 / (fan_in ** 0.5)
        w = jax.random.uniform(kw, (fan_out, fan_in), jnp.float32, -bound, bound)
        b = jax.random.uniform(kb, (fan_out,), jnp.float32, -bound, bound)
        return w, b

    w1, b1 = linear(ks[0], ks[1], in_dim, h1)
    w2, b2 = linear(ks[2], ks[3], h1, h2)
    w3, b3 = linear(ks[4], ks[5], h2, out_dim)
    return {"w1": w1, "b1": b1, "w2": w2, "b2": b2, "w3": w3, "b3": b3}


def mlp_reference(x, p):
    """Pure-JAX reference in exact f32 (matches PyTorch's f32 nn.Linear path)."""
    h = jnp.tanh(jnp.dot(x, p["w1"].T, precision=HP) + p["b1"])
    h = jnp.tanh(jnp.dot(h, p["w2"].T, precision=HP) + p["b2"])
    return jnp.dot(h, p["w3"].T, precision=HP) + p["b3"]


if __name__ == "__main__":
    key = jax.random.PRNGKey(0)
    k_x, k_p = jax.random.split(key)

    params = init_params(k_p)
    packed = pack_params(params)   # block-diagonal weights built once, outside the hot path

    # Small shapes consistent with the module (feature dim 8).
    B = 256                         # rows=16, tile_rows=8, grid=(2,)
    x = jax.random.normal(k_x, (B, IN_DIM), jnp.float32)
    out = jax.block_until_ready(mlp_forward(x, packed))
    ref = mlp_reference(x, params)
    assert out.shape == (B, OUT_DIM)
    assert jnp.allclose(out, ref, atol=1e-5, rtol=1e-5), "mismatch vs JAX reference"

    # Ragged batch exercises the pad-to-128 path (correctness-concern follow-up).
    x2 = jax.random.normal(k_x, (40, IN_DIM), jnp.float32)
    out2 = jax.block_until_ready(mlp_forward(x2, packed))
    assert out2.shape == (40, OUT_DIM)
    assert jnp.allclose(out2, mlp_reference(x2, params), atol=1e-5, rtol=1e-5), \
        "mismatch vs JAX reference (padded batch)"

    print("KERNEL_OK")
</pallas_src>

<mosaic_0001>
module attributes {stable_mosaic.version = 11 : i64} {
  func.func @mlp_kernel(%arg0: i32, %arg1: memref<8x128xf32, #tpu.memory_space<vmem>>, %arg2: memref<128x64xf32, #tpu.memory_space<vmem>>, %arg3: memref<1x64xf32, #tpu.memory_space<vmem>>, %arg4: memref<64x64xf32, #tpu.memory_space<vmem>>, %arg5: memref<1x64xf32, #tpu.memory_space<vmem>>, %arg6: memref<64x128xf32, #tpu.memory_space<vmem>>, %arg7: memref<1x128xf32, #tpu.memory_space<vmem>>, %arg8: memref<8x128xf32, #tpu.memory_space<vmem>>) attributes {dimension_semantics = [#tpu.dimension_semantics<parallel>], iteration_bounds = array<i64: 2>, scalar_prefetch = 0 : i64, scratch_operands = 0 : i64, tpu.core_type = #tpu.core_type<tc>, window_params = [{transform_indices = @transform_0, window_bounds = array<i64: 8, 128>}, {pipeline_mode = #tpu.pipeline_mode<synchronous>, transform_indices = @transform_1, window_bounds = array<i64: 128, 64>}, {pipeline_mode = #tpu.pipeline_mode<synchronous>, transform_indices = @transform_2, window_bounds = array<i64: 1, 64>}, {pipeline_mode = #tpu.pipeline_mode<synchronous>, transform_indices = @transform_3, window_bounds = array<i64: 64, 64>}, {pipeline_mode = #tpu.pipeline_mode<synchronous>, transform_indices = @transform_4, window_bounds = array<i64: 1, 64>}, {pipeline_mode = #tpu.pipeline_mode<synchronous>, transform_indices = @transform_5, window_bounds = array<i64: 64, 128>}, {pipeline_mode = #tpu.pipeline_mode<synchronous>, transform_indices = @transform_6, window_bounds = array<i64: 1, 128>}, {transform_indices = @transform_7, window_bounds = array<i64: 8, 128>}]} {
    %c0 = arith.constant 0 : index
    %c0_0 = arith.constant 0 : index
    %0 = vector.load %arg1[%c0, %c0_0] : memref<8x128xf32, #tpu.memory_space<vmem>>, vector<8x128xf32>
    %c0_1 = arith.constant 0 : index
    %c0_2 = arith.constant 0 : index
    %1 = vector.load %arg2[%c0_1, %c0_2] : memref<128x64xf32, #tpu.memory_space<vmem>>, vector<128x64xf32>
    %cst = arith.constant dense<0.000000e+00> : vector<8x64xf32>
    %2 = tpu.matmul %0, %1, %cst {dimension_numbers = #tpu.dot_dimension_numbers<[1], [0], [0], [1], [0, 0, 1, 1], [], []>, precision = #tpu.contract_precision<fp32>} : vector<8x128xf32>, vector<128x64xf32>, vector<8x64xf32> -> vector<8x64xf32>
    %c0_3 = arith.constant 0 : index
    %c0_4 = arith.constant 0 : index
    %3 = vector.load %arg3[%c0_3, %c0_4] : memref<1x64xf32, #tpu.memory_space<vmem>>, vector<1x64xf32>
    %4 = vector.broadcast %3 : vector<1x64xf32> to vector<8x64xf32>
    %5 = arith.addf %2, %4 : vector<8x64xf32>
    %6 = math.tanh %5 : vector<8x64xf32>
    %c0_5 = arith.constant 0 : index
    %c0_6 = arith.constant 0 : index
    %7 = vector.load %arg4[%c0_5, %c0_6] : memref<64x64xf32, #tpu.memory_space<vmem>>, vector<64x64xf32>
    %cst_7 = arith.constant dense<0.000000e+00> : vector<8x64xf32>
    %8 = tpu.matmul %6, %7, %cst_7 {dimension_numbers = #tpu.dot_dimension_numbers<[1], [0], [0], [1], [0, 0, 1, 1], [], []>, precision = #tpu.contract_precision<fp32>} : vector<8x64xf32>, vector<64x64xf32>, vector<8x64xf32> -> vector<8x64xf32>
    %c0_8 = arith.constant 0 : index
    %c0_9 = arith.constant 0 : index
    %9 = vector.load %arg5[%c0_8, %c0_9] : memref<1x64xf32, #tpu.memory_space<vmem>>, vector<1x64xf32>
    %10 = vector.broadcast %9 : vector<1x64xf32> to vector<8x64xf32>
    %11 = arith.addf %8, %10 : vector<8x64xf32>
    %12 = math.tanh %11 : vector<8x64xf32>
    %c0_10 = arith.constant 0 : index
    %c0_11 = arith.constant 0 : index
    %13 = vector.load %arg6[%c0_10, %c0_11] : memref<64x128xf32, #tpu.memory_space<vmem>>, vector<64x128xf32>
    %cst_12 = arith.constant dense<0.000000e+00> : vector<8x128xf32>
    %14 = tpu.matmul %12, %13, %cst_12 {dimension_numbers = #tpu.dot_dimension_numbers<[1], [0], [0], [1], [0, 0, 1, 1], [], []>, precision = #tpu.contract_precision<fp32>} : vector<8x64xf32>, vector<64x128xf32>, vector<8x128xf32> -> vector<8x128xf32>
    %c0_13 = arith.constant 0 : index
    %c0_14 = arith.constant 0 : index
    %15 = vector.load %arg7[%c0_13, %c0_14] : memref<1x128xf32, #tpu.memory_space<vmem>>, vector<1x128xf32>
    %16 = vector.broadcast %15 : vector<1x128xf32> to vector<8x128xf32>
    %17 = arith.addf %14, %16 : vector<8x128xf32>
    %c0_15 = arith.constant 0 : index
    %c0_16 = arith.constant 0 : index
    %18 = vector.load %arg8[%c0_15, %c0_16] : memref<8x128xf32, #tpu.memory_space<vmem>>, vector<8x128xf32>
    tpu.vector_store %arg8[%c0_15, %c0_16], %17 {strides = array<i32>} : memref<8x128xf32, #tpu.memory_space<vmem>>, vector<8x128xf32>,
    return
  }
  func.func @transform_0(%arg0: i32) -> (i32, i32) {
    %c0_i32 = arith.constant 0 : i32
    %c0_i32_0 = arith.constant 0 : i32
    return %arg0, %c0_i32 : i32, i32
  }
  func.func @transform_1(%arg0: i32) -> (i32, i32) {
    %c0_i32 = arith.constant 0 : i32
    %c0_i32_0 = arith.constant 0 : i32
    %c0_i32_1 = arith.constant 0 : i32
    return %c0_i32, %c0_i32_0 : i32, i32
  }
  func.func @transform_2(%arg0: i32) -> (i32, i32) {
    %c0_i32 = arith.constant 0 : i32
    %c0_i32_0 = arith.constant 0 : i32
    %c0_i32_1 = arith.constant 0 : i32
    return %c0_i32, %c0_i32_0 : i32, i32
  }
  func.func @transform_3(%arg0: i32) -> (i32, i32) {
    %c0_i32 = arith.constant 0 : i32
    %c0_i32_0 = arith.constant 0 : i32
    %c0_i32_1 = arith.constant 0 : i32
    return %c0_i32, %c0_i32_0 : i32, i32
  }
  func.func @transform_4(%arg0: i32) -> (i32, i32) {
    %c0_i32 = arith.constant 0 : i32
    %c0_i32_0 = arith.constant 0 : i32
    %c0_i32_1 = arith.constant 0 : i32
    return %c0_i32, %c0_i32_0 : i32, i32
  }
  func.func @transform_5(%arg0: i32) -> (i32, i32) {
    %c0_i32 = arith.constant 0 : i32
    %c0_i32_0 = arith.constant 0 : i32
    %c0_i32_1 = arith.constant 0 : i32
    return %c0_i32, %c0_i32_0 : i32, i32
  }
  func.func @transform_6(%arg0: i32) -> (i32, i32) {
    %c0_i32 = arith.constant 0 : i32
    %c0_i32_0 = arith.constant 0 : i32
    %c0_i32_1 = arith.constant 0 : i32
    return %c0_i32, %c0_i32_0 : i32, i32
  }
  func.func @transform_7(%arg0: i32) -> (i32, i32) {
    %c0_i32 = arith.constant 0 : i32
    %c0_i32_0 = arith.constant 0 : i32
    return %arg0, %c0_i32 : i32, i32
  }
}

</mosaic_0001>

<llo_original>
// kernel: tpu_custom_call.1
$region0: #{tpu_custom_call.1}
  #allocation0 [shape = 'u32[]', space=smem, size = 0x4, offset = 0x4, fixed_abs, tag = 'smem constant byte address 0x4 - core index']
  #allocation1 [shape = 'u32[72,128]{1,0:T(1,128)}', space=vmem, size = 0x9000, scoped, tag = 'internal scratch']
  %s0 = inlined_call_operand.vmem [shape: f32[16,128], index: 0, kind: input, shape index: {}]
  %s1 = inlined_call_operand.vmem [shape: f32[128,64], index: 1, kind: input, shape index: {}]
  %s2 = inlined_call_operand.vmem [shape: f32[1,64], index: 2, kind: input, shape index: {}]
  %s3 = inlined_call_operand.vmem [shape: f32[64,64], index: 3, kind: input, shape index: {}]
  %s4 = inlined_call_operand.vmem [shape: f32[1,64], index: 4, kind: input, shape index: {}]
  %s5 = inlined_call_operand.vmem [shape: f32[64,128], index: 5, kind: input, shape index: {}]
  %s6 = inlined_call_operand.vmem [shape: f32[1,128], index: 6, kind: input, shape index: {}]
  %s7 = inlined_call_operand.hbm [shape: f32[16,128], index: 7, kind: output, shape index: {}]
  %s8 = sld [smem:[#allocation0]]
  $region61: #{tpu_custom_call.1} parent=0
    _
  %s10 = ssub.s32 1, %s8
  %s11 = scalar_select 0, %s10, %s8
  $region1: #{tpu_custom_call.1} parent=0
    #allocation2 [shape = 'u8[8192]{0}', space=vmem, size = 0x2000, scoped, tag = 'output window, operand 0']
    #allocation3 [shape = 's32[2]{0}', space=sflag, size = 0x8, scoped, tag = 'scoped memory for tpu_custom_call.1']
    %12 = vsyncpa [#allocation3], 0
    %s13 = scalar_lea.sflag [#allocation3], 1
    %14 = vsyncpa %s13, 0
    loop: start=0, step=1, limit=4
    $region2: #{tpu_custom_call.1} parent=1 // loop_pre_header
      _
    $region3: #{tpu_custom_call.1} parent=1 // loop_header
      %s16 = sphi 0, %s20
      %p17 = scmp.ge.s32.totalorder %s16, 4
      %s26 = sphi 0, %s28
      %s29 = sphi 0, %s26
      %s30 = sphi 0, %s29
      %s46 = sphi 0, %s30
      %s50 = sphi 0, %s50
      %s52 = sphi 0, %s50
      %s53 = sphi 0, %s52
      %s67 = sphi 0, %s53
      %s71 = sphi 0, %s71
      %s73 = sphi 0, %s71
      %s74 = sphi 0, %s73
      %s88 = sphi 0, %s74
      %s92 = sphi 0, %s92
      %s94 = sphi 0, %s92
      %s95 = sphi 0, %s94
      %s109 = sphi 0, %s95
      %s113 = sphi 0, %s113
      %s115 = sphi 0, %s113
      %s116 = sphi 0, %s115
      %s130 = sphi 0, %s116
      %s134 = sphi 0, %s134
      %s136 = sphi 0, %s134
      %s137 = sphi 0, %s136
      %s151 = sphi 0, %s137
      %s155 = sphi 0, %s155
      %s157 = sphi 0, %s155
      %s158 = sphi 0, %s157
      %s172 = sphi 0, %s158
      %s178 = sphi 0, %s180
      %s181 = sphi 0, %s178
      %s182 = sphi 0, %s181
      %s198 = sphi 0, %s182
    $region4: #{tpu_custom_call.1} parent=1 // loop_header_branch
      %19 = sbr.rel (%p17) target = $region8
    $region5: #{tpu_custom_call.1} parent=1 // loop_body
      %s21 = ssub.s32 %s16, 1
      %s22 = ssub.s32 %s16, 2
      %s23 = sadd.s32 %s16, 1
      %s24 = ssub.s32 %s16, %s23
      %p25 = scmp.eq.s32.totalorder %s24, 0
      %s27 = sadd.s32 %s26, 1
      %s28 = scalar_select %p25, %s26, %s27
      %p31 = pneg %p25
      %p32 = scmp.eq.s32.totalorder %s16, 1
      %p33 = por %p31, %p32
      %p34 = scmp.ne.s32.totalorder %s26, %s29
      %p35 = scmp.eq.s32.totalorder %s16, 0
      %p36 = por %p34, %p35
      %p37 = scmp.ne.s32.totalorder %s26, %s29
      %p38 = scmp.eq.s32.totalorder %s21, 1
      %p39 = por %p37, %p38
      %p40 = scmp.ne.s32.totalorder %s29, %s30
      %p41 = scmp.eq.s32.totalorder %s21, 0
      %p42 = por %p40, %p41
      %p43 = scmp.ne.s32.totalorder %s29, %s30
      %p44 = scmp.eq.s32.totalorder %s22, 1
      %p45 = por %p43, %p44
      %p47 = scmp.ne.s32.totalorder %s30, %s46
      %p48 = scmp.eq.s32.totalorder %s22, 0
      %p49 = por %p47, %p48
      %s51 = sadd.s32 %s50, 1
      %p54 = scmp.eq.s32.totalorder %s16, 1
      %p55 = scmp.ne.s32.totalorder %s50, %s52
      %p56 = scmp.eq.s32.totalorder %s16, 0
      %p57 = por %p55, %p56
      %p58 = scmp.ne.s32.totalorder %s50, %s52
      %p59 = scmp.eq.s32.totalorder %s21, 1
      %p60 = por %p58, %p59
      %p61 = scmp.ne.s32.totalorder %s52, %s53
      %p62 = scmp.eq.s32.totalorder %s21, 0
      %p63 = por %p61, %p62
      %p64 = scmp.ne.s32.totalorder %s52, %s53
      %p65 = scmp.eq.s32.totalorder %s22, 1
      %p66 = por %p64, %p65
      %p68 = scmp.ne.s32.totalorder %s53, %s67
      %p69 = scmp.eq.s32.totalorder %s22, 0
      %p70 = por %p68, %p69
      %s72 = sadd.s32 %s71, 1
      %p75 = scmp.eq.s32.totalorder %s16, 1
      %p76 = scmp.ne.s32.totalorder %s71, %s73
      %p77 = scmp.eq.s32.totalorder %s16, 0
      %p78 = por %p76, %p77
      %p79 = scmp.ne.s32.totalorder %s71, %s73
      %p80 = scmp.eq.s32.totalorder %s21, 1
      %p81 = por %p79, %p80
      %p82 = scmp.ne.s32.totalorder %s73, %s74
      %p83 = scmp.eq.s32.totalorder %s21, 0
      %p84 = por %p82, %p83
      %p85 = scmp.ne.s32.totalorder %s73, %s74
      %p86 = scmp.eq.s32.totalorder %s22, 1
      %p87 = por %p85, %p86
      %p89 = scmp.ne.s32.totalorder %s74, %s88
      %p90 = scmp.eq.s32.totalorder %s22, 0
      %p91 = por %p89, %p90
      %s93 = sadd.s32 %s92, 1
      %p96 = scmp.eq.s32.totalorder %s16, 1
      %p97 = scmp.ne.s32.totalorder %s92, %s94
      %p98 = scmp.eq.s32.totalorder %s16, 0
      %p99 = por %p97, %p98
      %p100 = scmp.ne.s32.totalorder %s92, %s94
      %p101 = scmp.eq.s32.totalorder %s21, 1
      %p102 = por %p100, %p101
      %p103 = scmp.ne.s32.totalorder %s94, %s95
      %p104 = scmp.eq.s32.totalorder %s21, 0
      %p105 = por %p103, %p104
      %p106 = scmp.ne.s32.totalorder %s94, %s95
      %p107 = scmp.eq.s32.totalorder %s22, 1
      %p108 = por %p106, %p107
      %p110 = scmp.ne.s32.totalorder %s95, %s109
      %p111 = scmp.eq.s32.totalorder %s22, 0
      %p112 = por %p110, %p111
      %s114 = sadd.s32 %s113, 1
      %p117 = scmp.eq.s32.totalorder %s16, 1
      %p118 = scmp.ne.s32.totalorder %s113, %s115
      %p119 = scmp.eq.s32.totalorder %s16, 0
      %p120 = por %p118, %p119
      %p121 = scmp.ne.s32.totalorder %s113, %s115
      %p122 = scmp.eq.s32.totalorder %s21, 1
      %p123 = por %p121, %p122
      %p124 = scmp.ne.s32.totalorder %s115, %s116
      %p125 = scmp.eq.s32.totalorder %s21, 0
      %p126 = por %p124, %p125
      %p127 = scmp.ne.s32.totalorder %s115, %s116
      %p128 = scmp.eq.s32.totalorder %s22, 1
      %p129 = por %p127, %p128
      %p131 = scmp.ne.s32.totalorder %s116, %s130
      %p132 = scmp.eq.s32.totalorder %s22, 0
      %p133 = por %p131, %p132
      %s135 = sadd.s32 %s134, 1
      %p138 = scmp.eq.s32.totalorder %s16, 1
      %p139 = scmp.ne.s32.totalorder %s134, %s136
      %p140 = scmp.eq.s32.totalorder %s16, 0
      %p141 = por %p139, %p140
      %p142 = scmp.ne.s32.totalorder %s134, %s136
      %p143 = scmp.eq.s32.totalorder %s21, 1
      %p144 = por %p142, %p143
      %p145 = scmp.ne.s32.totalorder %s136, %s137
      %p146 = scmp.eq.s32.totalorder %s21, 0
      %p147 = por %p145, %p146
      %p148 = scmp.ne.s32.totalorder %s136, %s137
      %p149 = scmp.eq.s32.totalorder %s22, 1
      %p150 = por %p148, %p149
      %p152 = scmp.ne.s32.totalorder %s137, %s151
      %p153 = scmp.eq.s32.totalorder %s22, 0
      %p154 = por %p152, %p153
      %s156 = sadd.s32 %s155, 1
      %p159 = scmp.eq.s32.totalorder %s16, 1
      %p160 = scmp.ne.s32.totalorder %s155, %s157
      %p161 = scmp.eq.s32.totalorder %s16, 0
      %p162 = por %p160, %p161
      %p163 = scmp.ne.s32.totalorder %s155, %s157
      %p164 = scmp.eq.s32.totalorder %s21, 1
      %p165 = por %p163, %p164
      %p166 = scmp.ne.s32.totalorder %s157, %s158
      %p167 = scmp.eq.s32.totalorder %s21, 0
      %p168 = por %p166, %p167
      %p169 = scmp.ne.s32.totalorder %s157, %s158
      %p170 = scmp.eq.s32.totalorder %s22, 1
      %p171 = por %p169, %p170
      %p173 = scmp.ne.s32.totalorder %s158, %s172
      %p174 = scmp.eq.s32.totalorder %s22, 0
      %p175 = por %p173, %p174
      %s176 = ssub.s32 %s16, %s23
      %p177 = scmp.eq.s32.totalorder %s176, 0
      %s179 = sadd.s32 %s178, 1
      %s180 = scalar_select %p177, %s178, %s179
      %p183 = pneg %p177
      %p184 = scmp.eq.s32.totalorder %s16, 1
      %p185 = por %p183, %p184
      %p186 = scmp.ne.s32.totalorder %s178, %s181
      %p187 = scmp.eq.s32.totalorder %s16, 0
      %p188 = por %p186, %p187
      %p189 = scmp.ne.s32.totalorder %s178, %s181
      %p190 = scmp.eq.s32.totalorder %s21, 1
      %p191 = por %p189, %p190
      %p192 = scmp.ne.s32.totalorder %s181, %s182
      %p193 = scmp.eq.s32.totalorder %s21, 0
      %p194 = por %p192, %p193
      %p195 = scmp.ne.s32.totalorder %s181, %s182
      %p196 = scmp.eq.s32.totalorder %s22, 1
      %p197 = por %p195, %p196
      %p199 = scmp.ne.s32.totalorder %s182, %s198
      %p200 = scmp.eq.s32.totalorder %s22, 0
      %p201 = por %p199, %p200
      %p202 = scmp.le.s32.totalorder 1, %s16
      %p203 = scmp.lt.s32.totalorder %s16, 3
      %p204 = pnand %p202, %p203
      %p205 = pneg %p204
      // Predicated region
      $region9: #{tpu_custom_call.1} parent=5 // pred_check
        _
      $region10: #{tpu_custom_call.1} parent=5 // pred_check_branch
        %207 = sbr.rel (%p204) target = $region12
      $region11: #{tpu_custom_call.1} parent=5 // pred_region
        %s208 = ssub.s32 %s16, 1
        // Predicated region
        $region13: #{tpu_custom_call.1} parent=11 // pred_check
          %p209 = pneg %p63
        $region14: #{tpu_custom_call.1} parent=11 // pred_check_branch
          %211 = sbr.rel (%p209) target = $region16
        $region15: #{tpu_custom_call.1} parent=11 // pred_region
          _
        $region16: #{tpu_custom_call.1} parent=11 // pred_fallthru
          _
        // Predicated region
        $region17: #{tpu_custom_call.1} parent=11 // pred_check
          %p212 = pneg %p84
        $region18: #{tpu_custom_call.1} parent=11 // pred_check_branch
          %214 = sbr.rel (%p212) target = $region20
        $region19: #{tpu_custom_call.1} parent=11 // pred_region
          _
        $region20: #{tpu_custom_call.1} parent=11 // pred_fallthru
          _
        // Predicated region
        $region21: #{tpu_custom_call.1} parent=11 // pred_check
          %p215 = pneg %p105
        $region22: #{tpu_custom_call.1} parent=11 // pred_check_branch
          %217 = sbr.rel (%p215) target = $region24
        $region23: #{tpu_custom_call.1} parent=11 // pred_region
          _
        $region24: #{tpu_custom_call.1} parent=11 // pred_fallthru
          _
        // Predicated region
        $region25: #{tpu_custom_call.1} parent=11 // pred_check
          %p218 = pneg %p126
        $region26: #{tpu_custom_call.1} parent=11 // pred_check_branch
          %220 = sbr.rel (%p218) target = $region28
        $region27: #{tpu_custom_call.1} parent=11 // pred_region
          _
        $region28: #{tpu_custom_call.1} parent=11 // pred_fallthru
          _
        // Predicated region
        $region29: #{tpu_custom_call.1} parent=11 // pred_check
          %p221 = pneg %p147
        $region30: #{tpu_custom_call.1} parent=11 // pred_check_branch
          %223 = sbr.rel (%p221) target = $region32
        $region31: #{tpu_custom_call.1} parent=11 // pred_region
          _
        $region32: #{tpu_custom_call.1} parent=11 // pred_fallthru
          _
        // Predicated region
        $region33: #{tpu_custom_call.1} parent=11 // pred_check
          %p224 = pneg %p168
        $region34: #{tpu_custom_call.1} parent=11 // pred_check_branch
          %226 = sbr.rel (%p224) target = $region36
        $region35: #{tpu_custom_call.1} parent=11 // pred_region
          _
        $region36: #{tpu_custom_call.1} parent=11 // pred_fallthru
          _
      $region12: #{tpu_custom_call.1} parent=5 // pred_fallthru
        _
      %p227 = scmp.lt.s32.totalorder %s16, 2
      // Predicated region
      $region37: #{tpu_custom_call.1} parent=5 // pred_check
        %p228 = pneg %p227
      $region38: #{tpu_custom_call.1} parent=5 // pred_check_branch
        %230 = sbr.rel (%p228) target = $region40
      $region39: #{tpu_custom_call.1} parent=5 // pred_region
        // Predicated region
        $region41: #{tpu_custom_call.1} parent=39 // pred_check
          %p231 = pneg %p36
        $region42: #{tpu_custom_call.1} parent=39 // pred_check_branch
          %233 = sbr.rel (%p231) target = $region44
        $region43: #{tpu_custom_call.1} parent=39 // pred_region
          %p234 = scmp.lt.s32.totalorder %s16, 1
          %s235 = scalar_select %p234, %s16, 1
          %s236 = smul.addr %s235, 8
          %s237 = scalar_lea.vmem %s0, %s236
        $region44: #{tpu_custom_call.1} parent=39 // pred_fallthru
          _
      $region40: #{tpu_custom_call.1} parent=5 // pred_fallthru
        _
      %p238 = scmp.le.s32.totalorder 1, %s16
      %p239 = scmp.lt.s32.totalorder %s16, 3
      %p240 = pnand %p238, %p239
      %p241 = pneg %p240
      // Predicated region
      $region45: #{tpu_custom_call.1} parent=5 // pred_check
        _
      $region46: #{tpu_custom_call.1} parent=5 // pred_check_branch
        %243 = sbr.rel (%p240) target = $region48
      $region47: #{tpu_custom_call.1} parent=5 // pred_region
        %s244 = ssub.s32 %s16, 1
        %p245 = scmp.lt.s32.totalorder %s21, 1
        %s246 = scalar_select %p245, %s21, 1
        %s247 = smul.addr %s246, 8
        %s248 = scalar_lea.vmem %s0, %s247
        %p249 = pneg %p42
        %p250 = pneg %p39
        %p251 = pneg %p63
        %p252 = pneg %p60
        %p253 = pneg %p84
        %p254 = pneg %p81
        %p255 = pneg %p105
        %p256 = pneg %p102
        %p257 = pneg %p126
        %p258 = pneg %p123
        %p259 = pneg %p147
        %p260 = pneg %p144
        %p261 = pneg %p168
        %p262 = pneg %p165
        %p263 = pneg %p194
        %p264 = pneg %p191
        %s265 = sand.u32 %s181, 1
        %s266 = scalar_lea.sflag [#allocation3], %s265
        %s267 = sand.u32 %s181, 1
        %s268 = smul.addr %s267, 8
        %s269 = scalar_lea.vmem [#allocation2], %s268
        %p270 = scmp.lt.s32.totalorder %s21, 1
        %s271 = scalar_select %p270, %s21, 1
        %s272 = smul.addr %s271, 8
        %s273 = scalar_lea.vmem %s0, %s272
        %v274 = vld [vmem:[%s273] sm:$0xff]
        %v275 = vld [vmem:[%s1] sm:$0xff]
        %v276 = vld [vmem:[%s1 + $0x8] sm:$0xff]
        %v277 = vld [vmem:[%s1 + $0x10] sm:$0xff]
        %v278 = vld [vmem:[%s1 + $0x18] sm:$0xff]
        %v279 = vld [vmem:[%s1 + $0x20] sm:$0xff]
        %v280 = vld [vmem:[%s1 + $0x28] sm:$0xff]
        %v281 = vld [vmem:[%s1 + $0x30] sm:$0xff]
        %v282 = vld [vmem:[%s1 + $0x38] sm:$0xff]
        %v283 = vld [vmem:[%s1 + $0x40] sm:$0xff]
        %v284 = vld [vmem:[%s1 + $0x48] sm:$0xff]
        %v285 = vld [vmem:[%s1 + $0x50] sm:$0xff]
        %v286 = vld [vmem:[%s1 + $0x58] sm:$0xff]
        %v287 = vld [vmem:[%s1 + $0x60] sm:$0xff]
        %v288 = vld [vmem:[%s1 + $0x68] sm:$0xff]
        %v289 = vld [vmem:[%s1 + $0x70] sm:$0xff]
        %v290 = vld [vmem:[%s1 + $0x78] sm:$0xff]
        %v291 = vld [vmem:[%s2] sm:$0x1]
        %v293 = vperm.slane %v291, 0
        %v295 = vand.u32 %v290, 4294901760
        %296 = vmatpush.msra.mxu0 %v295
        %v297 = vand.u32 %v289, 4294901760
        %298 = vmatpush.msra.mxu0 %v297
        %v299 = vand.u32 %v288, 4294901760
        %300 = vmatpush.msra.mxu0 %v299
        %v301 = vand.u32 %v287, 4294901760
        %302 = vmatpush.msra.mxu0 %v301
        %v303 = vand.u32 %v286, 4294901760
        %304 = vmatpush.msra.mxu0 %v303
        %v305 = vand.u32 %v285, 4294901760
        %306 = vmatpush.msra.mxu0 %v305
        %v307 = vand.u32 %v284, 4294901760
        %308 = vmatpush.msra.mxu0 %v307
        %v309 = vand.u32 %v283, 4294901760
        %310 = vmatpush.msra.mxu0 %v309
        %v311 = vand.u32 %v282, 4294901760
        %312 = vmatpush.msra.mxu0 %v311
        %v313 = vand.u32 %v281, 4294901760
        %314 = vmatpush.msra.mxu0 %v313
        %v315 = vand.u32 %v280, 4294901760
        %316 = vmatpush.msra.mxu0 %v315
        %v317 = vand.u32 %v279, 4294901760
        %318 = vmatpush.msra.mxu0 %v317
        %v319 = vand.u32 %v278, 4294901760
        %320 = vmatpush.msra.mxu0 %v319
        %v321 = vand.u32 %v277, 4294901760
        %322 = vmatpush.msra.mxu0 %v321
        %v323 = vand.u32 %v276, 4294901760
        %324 = vmatpush.msra.mxu0 %v323
        %v325 = vand.u32 %v275, 4294901760
        %326 = vmatpush.msra.mxu0 %v325
        %v327 = vand.u32 %v274, 4294901760
        %v328 = vsub.f32 %v274, %v327
        %v329 = vand.u32 %v328, 4294901760
        %v330 = vsub.f32 %v328, %v329
        %v331 = vand.u32 %v330, 4294901760
        %332 = vmatmul.f32.gmra.mxu0 %v331
        %v333 = vpop.f32.mrf.mxu0
        %v334 = vadd.f32 %v293, %v333
        %335 = vdwg.mxu0
        %v336 = vand.u32 %v290, 4294901760
        %v337 = vsub.f32 %v290, %v336
        %v338 = vand.u32 %v337, 4294901760
        %v339 = vsub.f32 %v337, %v338
        %v340 = vand.u32 %v339, 4294901760
        %341 = vmatpush.msra.mxu0 %v340
        %v342 = vand.u32 %v289, 4294901760
        %v343 = vsub.f32 %v289, %v342
        %v344 = vand.u32 %v343, 4294901760
        %v345 = vsub.f32 %v343, %v344
        %v346 = vand.u32 %v345, 4294901760
        %347 = vmatpush.msra.mxu0 %v346
        %v348 = vand.u32 %v288, 4294901760
        %v349 = vsub.f32 %v288, %v348
        %v350 = vand.u32 %v349, 4294901760
        %v351 = vsub.f32 %v349, %v350
        %v352 = vand.u32 %v351, 4294901760
        %353 = vmatpush.msra.mxu0 %v352
        %v354 = vand.u32 %v287, 4294901760
        %v355 = vsub.f32 %v287, %v354
        %v356 = vand.u32 %v355, 4294901760
        %v357 = vsub.f32 %v355, %v356
        %v358 = vand.u32 %v357, 4294901760
        %359 = vmatpush.msra.mxu0 %v358
        %v360 = vand.u32 %v286, 4294901760
        %v361 = vsub.f32 %v286, %v360
        %v362 = vand.u32 %v361, 4294901760
        %v363 = vsub.f32 %v361, %v362
        %v364 = vand.u32 %v363, 4294901760
        %365 = vmatpush.msra.mxu0 %v364
        %v366 = vand.u32 %v285, 4294901760
        %v367 = vsub.f32 %v285, %v366
        %v368 = vand.u32 %v367, 4294901760
        %v369 = vsub.f32 %v367, %v368
        %v370 = vand.u32 %v369, 4294901760
        %371 = vmatpush.msra.mxu0 %v370
        %v372 = vand.u32 %v284, 4294901760
        %v373 = vsub.f32 %v284, %v372
        %v374 = vand.u32 %v373, 4294901760
        %v375 = vsub.f32 %v373, %v374
        %v376 = vand.u32 %v375, 4294901760
        %377 = vmatpush.msra.mxu0 %v376
        %v378 = vand.u32 %v283, 4294901760
        %v379 = vsub.f32 %v283, %v378
        %v380 = vand.u32 %v379, 4294901760
        %v381 = vsub.f32 %v379, %v380
        %v382 = vand.u32 %v381, 4294901760
        %383 = vmatpush.msra.mxu0 %v382
        %v384 = vand.u32 %v282, 4294901760
        %v385 = vsub.f32 %v282, %v384
        %v386 = vand.u32 %v385, 4294901760
        %v387 = vsub.f32 %v385, %v386
        %v388 = vand.u32 %v387, 4294901760
        %389 = vmatpush.msra.mxu0 %v388
        %v390 = vand.u32 %v281, 4294901760
        %v391 = vsub.f32 %v281, %v390
        %v392 = vand.u32 %v391, 4294901760
        %v393 = vsub.f32 %v391, %v392
        %v394 = vand.u32 %v393, 4294901760
        %395 = vmatpush.msra.mxu0 %v394
        %v396 = vand.u32 %v280, 4294901760
        %v397 = vsub.f32 %v280, %v396
        %v398 = vand.u32 %v397, 4294901760
        %v399 = vsub.f32 %v397, %v398
        %v400 = vand.u32 %v399, 4294901760
        %401 = vmatpush.msra.mxu0 %v400
        %v402 = vand.u32 %v279, 4294901760
        %v403 = vsub.f32 %v279, %v402
        %v404 = vand.u32 %v403, 4294901760
        %v405 = vsub.f32 %v403, %v404
        %v406 = vand.u32 %v405, 4294901760
        %407 = vmatpush.msra.mxu0 %v406
        %v408 = vand.u32 %v278, 4294901760
        %v409 = vsub.f32 %v278, %v408
        %v410 = vand.u32 %v409, 4294901760
        %v411 = vsub.f32 %v409, %v410
        %v412 = vand.u32 %v411, 4294901760
        %413 = vmatpush.msra.mxu0 %v412
        %v414 = vand.u32 %v277, 4294901760
        %v415 = vsub.f32 %v277, %v414
        %v416 = vand.u32 %v415, 4294901760
        %v417 = vsub.f32 %v415, %v416
        %v418 = vand.u32 %v417, 4294901760
        %419 = vmatpush.msra.mxu0 %v418
        %v420 = vand.u32 %v276, 4294901760
        %v421 = vsub.f32 %v276, %v420
        %v422 = vand.u32 %v421, 4294901760
        %v423 = vsub.f32 %v421, %v422
        %v424 = vand.u32 %v423, 4294901760
        %425 = vmatpush.msra.mxu0 %v424
        %v426 = vand.u32 %v275, 4294901760
        %v427 = vsub.f32 %v275, %v426
        %v428 = vand.u32 %v427, 4294901760
        %v429 = vsub.f32 %v427, %v428
        %v430 = vand.u32 %v429, 4294901760
        %431 = vmatpush.msra.mxu0 %v430
        %v432 = vand.u32 %v274, 4294901760
        %433 = vmatmul.f32.gmra.mxu0 %v432
        %v434 = vpop.f32.mrf.mxu0
        %v435 = vadd.f32 %v334, %v434
        %436 = vdwg.mxu0
        %v437 = vand.u32 %v290, 4294901760
        %v438 = vsub.f32 %v290, %v437
        %439 = vmatpush.msra.mxu0 %v438
        %v440 = vand.u32 %v289, 4294901760
        %v441 = vsub.f32 %v289, %v440
        %442 = vmatpush.msra.mxu0 %v441
        %v443 = vand.u32 %v288, 4294901760
        %v444 = vsub.f32 %v288, %v443
        %445 = vmatpush.msra.mxu0 %v444
        %v446 = vand.u32 %v287, 4294901760
        %v447 = vsub.f32 %v287, %v446
        %448 = vmatpush.msra.mxu0 %v447
        %v449 = vand.u32 %v286, 4294901760
        %v450 = vsub.f32 %v286, %v449
        %451 = vmatpush.msra.mxu0 %v450
        %v452 = vand.u32 %v285, 4294901760
        %v453 = vsub.f32 %v285, %v452
        %454 = vmatpush.msra.mxu0 %v453
        %v455 = vand.u32 %v284, 4294901760
        %v456 = vsub.f32 %v284, %v455
        %457 = vmatpush.msra.mxu0 %v456
        %v458 = vand.u32 %v283, 4294901760
        %v459 = vsub.f32 %v283, %v458
        %460 = vmatpush.msra.mxu0 %v459
        %v461 = vand.u32 %v282, 4294901760
        %v462 = vsub.f32 %v282, %v461
        %463 = vmatpush.msra.mxu0 %v462
        %v464 = vand.u32 %v281, 4294901760
        %v465 = vsub.f32 %v281, %v464
        %466 = vmatpush.msra.mxu0 %v465
        %v467 = vand.u32 %v280, 4294901760
        %v468 = vsub.f32 %v280, %v467
        %469 = vmatpush.msra.mxu0 %v468
        %v470 = vand.u32 %v279, 4294901760
        %v471 = vsub.f32 %v279, %v470
        %472 = vmatpush.msra.mxu0 %v471
        %v473 = vand.u32 %v278, 4294901760
        %v474 = vsub.f32 %v278, %v473
        %475 = vmatpush.msra.mxu0 %v474
        %v476 = vand.u32 %v277, 4294901760
        %v477 = vsub.f32 %v277, %v476
        %478 = vmatpush.msra.mxu0 %v477
        %v479 = vand.u32 %v276, 4294901760
        %v480 = vsub.f32 %v276, %v479
        %481 = vmatpush.msra.mxu0 %v480
        %v482 = vand.u32 %v275, 4294901760
        %v483 = vsub.f32 %v275, %v482
        %484 = vmatpush.msra.mxu0 %v483
        %v485 = vand.u32 %v274, 4294901760
        %v486 = vsub.f32 %v274, %v485
        %487 = vmatmul.f32.gmra.mxu0 %v486
        %v488 = vpop.f32.mrf.mxu0
        %v489 = vadd.f32 %v435, %v488
        %490 = vdwg.mxu0
        %v491 = vand.u32 %v290, 4294901760
        %492 = vmatpush.msra.mxu0 %v491
        %v493 = vand.u32 %v289, 4294901760
        %494 = vmatpush.msra.mxu0 %v493
        %v495 = vand.u32 %v288, 4294901760
        %496 = vmatpush.msra.mxu0 %v495
        %v497 = vand.u32 %v287, 4294901760
        %498 = vmatpush.msra.mxu0 %v497
        %v499 = vand.u32 %v286, 4294901760
        %500 = vmatpush.msra.mxu0 %v499
        %v501 = vand.u32 %v285, 4294901760
        %502 = vmatpush.msra.mxu0 %v501
        %v503 = vand.u32 %v284, 4294901760
        %504 = vmatpush.msra.mxu0 %v503
        %v505 = vand.u32 %v283, 4294901760
        %506 = vmatpush.msra.mxu0 %v505
        %v507 = vand.u32 %v282, 4294901760
        %508 = vmatpush.msra.mxu0 %v507
        %v509 = vand.u32 %v281, 4294901760
        %510 = vmatpush.msra.mxu0 %v509
        %v511 = vand.u32 %v280, 4294901760
        %512 = vmatpush.msra.mxu0 %v511
        %v513 = vand.u32 %v279, 4294901760
        %514 = vmatpush.msra.mxu0 %v513
        %v515 = vand.u32 %v278, 4294901760
        %516 = vmatpush.msra.mxu0 %v515
        %v517 = vand.u32 %v277, 4294901760
        %518 = vmatpush.msra.mxu0 %v517
        %v519 = vand.u32 %v276, 4294901760
        %520 = vmatpush.msra.mxu0 %v519
        %v521 = vand.u32 %v275, 4294901760
        %522 = vmatpush.msra.mxu0 %v521
        %v523 = vand.u32 %v274, 4294901760
        %v524 = vsub.f32 %v274, %v523
        %v525 = vand.u32 %v524, 4294901760
        %526 = vmatmul.f32.gmra.mxu0 %v525
        %v527 = vpop.f32.mrf.mxu0
        %v528 = vadd.f32 %v489, %v527
        %529 = vdwg.mxu0
        %v530 = vand.u32 %v290, 4294901760
        %v531 = vsub.f32 %v290, %v530
        %v532 = vand.u32 %v531, 4294901760
        %533 = vmatpush.msra.mxu0 %v532
        %v534 = vand.u32 %v289, 4294901760
        %v535 = vsub.f32 %v289, %v534
        %v536 = vand.u32 %v535, 4294901760
        %537 = vmatpush.msra.mxu0 %v536
        %v538 = vand.u32 %v288, 4294901760
        %v539 = vsub.f32 %v288, %v538
        %v540 = vand.u32 %v539, 4294901760
        %541 = vmatpush.msra.mxu0 %v540
        %v542 = vand.u32 %v287, 4294901760
        %v543 = vsub.f32 %v287, %v542
        %v544 = vand.u32 %v543, 4294901760
        %545 = vmatpush.msra.mxu0 %v544
        %v546 = vand.u32 %v286, 4294901760
        %v547 = vsub.f32 %v286, %v546
        %v548 = vand.u32 %v547, 4294901760
        %549 = vmatpush.msra.mxu0 %v548
        %v550 = vand.u32 %v285, 4294901760
        %v551 = vsub.f32 %v285, %v550
        %v552 = vand.u32 %v551, 4294901760
        %553 = vmatpush.msra.mxu0 %v552
        %v554 = vand.u32 %v284, 4294901760
        %v555 = vsub.f32 %v284, %v554
        %v556 = vand.u32 %v555, 4294901760
        %557 = vmatpush.msra.mxu0 %v556
        %v558 = vand.u32 %v283, 4294901760
        %v559 = vsub.f32 %v283, %v558
        %v560 = vand.u32 %v559, 4294901760
        %561 = vmatpush.msra.mxu0 %v560
        %v562 = vand.u32 %v282, 4294901760
        %v563 = vsub.f32 %v282, %v562
        %v564 = vand.u32 %v563, 4294901760
        %565 = vmatpush.msra.mxu0 %v564
        %v566 = vand.u32 %v281, 4294901760
        %v567 = vsub.f32 %v281, %v566
        %v568 = vand.u32 %v567, 4294901760
        %569 = vmatpush.msra.mxu0 %v568
        %v570 = vand.u32 %v280, 4294901760
        %v571 = vsub.f32 %v280, %v570
        %v572 = vand.u32 %v571, 4294901760
        %573 = vmatpush.msra.mxu0 %v572
        %v574 = vand.u32 %v279, 4294901760
        %v575 = vsub.f32 %v279, %v574
        %v576 = vand.u32 %v575, 4294901760
        %577 = vmatpush.msra.mxu0 %v576
        %v578 = vand.u32 %v278, 4294901760
        %v579 = vsub.f32 %v278, %v578
        %v580 = vand.u32 %v579, 4294901760
        %581 = vmatpush.msra.mxu0 %v580
        %v582 = vand.u32 %v277, 4294901760
        %v583 = vsub.f32 %v277, %v582
        %v584 = vand.u32 %v583, 4294901760
        %585 = vmatpush.msra.mxu0 %v584
        %v586 = vand.u32 %v276, 4294901760
        %v587 = vsub.f32 %v276, %v586
        %v588 = vand.u32 %v587, 4294901760
        %589 = vmatpush.msra.mxu0 %v588
        %v590 = vand.u32 %v275, 4294901760
        %v591 = vsub.f32 %v275, %v590
        %v592 = vand.u32 %v591, 4294901760
        %593 = vmatpush.msra.mxu0 %v592
        %v594 = vand.u32 %v274, 4294901760
        %595 = vmatmul.f32.gmra.mxu0 %v594
        %v596 = vpop.f32.mrf.mxu0
        %v597 = vadd.f32 %v528, %v596
        %598 = vdwg.mxu0
        %v599 = vand.u32 %v290, 4294901760
        %600 = vmatpush.msra.mxu0 %v599
        %v601 = vand.u32 %v289, 4294901760
        %602 = vmatpush.msra.mxu0 %v601
        %v603 = vand.u32 %v288, 4294901760
        %604 = vmatpush.msra.mxu0 %v603
        %v605 = vand.u32 %v287, 4294901760
        %606 = vmatpush.msra.mxu0 %v605
        %v607 = vand.u32 %v286, 4294901760
        %608 = vmatpush.msra.mxu0 %v607
        %v609 = vand.u32 %v285, 4294901760
        %610 = vmatpush.msra.mxu0 %v609
        %v611 = vand.u32 %v284, 4294901760
        %612 = vmatpush.msra.mxu0 %v611
        %v613 = vand.u32 %v283, 4294901760
        %614 = vmatpush.msra.mxu0 %v613
        %v615 = vand.u32 %v282, 4294901760
        %616 = vmatpush.msra.mxu0 %v615
        %v617 = vand.u32 %v281, 4294901760
        %618 = vmatpush.msra.mxu0 %v617
        %v619 = vand.u32 %v280, 4294901760
        %620 = vmatpush.msra.mxu0 %v619
        %v621 = vand.u32 %v279, 4294901760
        %622 = vmatpush.msra.mxu0 %v621
        %v623 = vand.u32 %v278, 4294901760
        %624 = vmatpush.msra.mxu0 %v623
        %v625 = vand.u32 %v277, 4294901760
        %626 = vmatpush.msra.mxu0 %v625
        %v627 = vand.u32 %v276, 4294901760
        %628 = vmatpush.msra.mxu0 %v627
        %v629 = vand.u32 %v275, 4294901760
        %630 = vmatpush.msra.mxu0 %v629
        %v631 = vand.u32 %v274, 4294901760
        %632 = vmatmul.f32.gmra.mxu0 %v631
        %v633 = vpop.f32.mrf.mxu0
        %v634 = vadd.f32 %v597, %v633
        %635 = vdwg.mxu0
        %v636 = vtanh.pop %v634
        %v637 = vld [vmem:[%s3] sm:$0xff]
        %v638 = vld [vmem:[%s3 + $0x8] sm:$0xff]
        %v639 = vld [vmem:[%s3 + $0x10] sm:$0xff]
        %v640 = vld [vmem:[%s3 + $0x18] sm:$0xff]
        %v641 = vld [vmem:[%s3 + $0x20] sm:$0xff]
        %v642 = vld [vmem:[%s3 + $0x28] sm:$0xff]
        %v643 = vld [vmem:[%s3 + $0x30] sm:$0xff]
        %v644 = vld [vmem:[%s3 + $0x38] sm:$0xff]
        %v645 = vld [vmem:[%s4] sm:$0x1]
        %v647 = vperm.slane %v645, 0
        %vm649 = vcmask 523264
        %v651 = vsel %vm649, %v636, 0
        %653 = vmatpush.msra.mxu0 0.0
        %654 = vmatpush.msra.mxu0 0.0
        %655 = vmatpush.msra.mxu0 0.0
        %656 = vmatpush.msra.mxu0 0.0
        %657 = vmatpush.msra.mxu0 0.0
        %658 = vmatpush.msra.mxu0 0.0
        %659 = vmatpush.msra.mxu0 0.0
        %660 = vmatpush.msra.mxu0 0.0
        %v661 = vand.u32 %v644, 4294901760
        %662 = vmatpush.msra.mxu0 %v661
        %v663 = vand.u32 %v643, 4294901760
        %664 = vmatpush.msra.mxu0 %v663
        %v665 = vand.u32 %v642, 4294901760
        %666 = vmatpush.msra.mxu0 %v665
        %v667 = vand.u32 %v641, 4294901760
        %668 = vmatpush.msra.mxu0 %v667
        %v669 = vand.u32 %v640, 4294901760
        %670 = vmatpush.msra.mxu0 %v669
        %v671 = vand.u32 %v639, 4294901760
        %672 = vmatpush.msra.mxu0 %v671
        %v673 = vand.u32 %v638, 4294901760
        %674 = vmatpush.msra.mxu0 %v673
        %v675 = vand.u32 %v637, 4294901760
        %676 = vmatpush.msra.mxu0 %v675
        %v677 = vand.u32 %v651, 4294901760
        %v678 = vsub.f32 %v651, %v677
        %v679 = vand.u32 %v678, 4294901760
        %v680 = vsub.f32 %v678, %v679
        %v681 = vand.u32 %v680, 4294901760
        %682 = vmatmul.f32.gmra.mxu0 %v681
        %v683 = vpop.f32.mrf.mxu0
        %v684 = vadd.f32 %v647, %v683
        %685 = vdwg.mxu0
        %686 = vmatpush.msra.mxu0 0.0
        %687 = vmatpush.msra.mxu0 0.0
        %688 = vmatpush.msra.mxu0 0.0
        %689 = vmatpush.msra.mxu0 0.0
        %690 = vmatpush.msra.mxu0 0.0
        %691 = vmatpush.msra.mxu0 0.0
        %692 = vmatpush.msra.mxu0 0.0
        %693 = vmatpush.msra.mxu0 0.0
        %v694 = vand.u32 %v644, 4294901760
        %v695 = vsub.f32 %v644, %v694
        %v696 = vand.u32 %v695, 4294901760
        %v697 = vsub.f32 %v695, %v696
        %v698 = vand.u32 %v697, 4294901760
        %699 = vmatpush.msra.mxu0 %v698
        %v700 = vand.u32 %v643, 4294901760
        %v701 = vsub.f32 %v643, %v700
        %v702 = vand.u32 %v701, 4294901760
        %v703 = vsub.f32 %v701, %v702
        %v704 = vand.u32 %v703, 4294901760
        %705 = vmatpush.msra.mxu0 %v704
        %v706 = vand.u32 %v642, 4294901760
        %v707 = vsub.f32 %v642, %v706
        %v708 = vand.u32 %v707, 4294901760
        %v709 = vsub.f32 %v707, %v708
        %v710 = vand.u32 %v709, 4294901760
        %711 = vmatpush.msra.mxu0 %v710
        %v712 = vand.u32 %v641, 4294901760
        %v713 = vsub.f32 %v641, %v712
        %v714 = vand.u32 %v713, 4294901760
        %v715 = vsub.f32 %v713, %v714
        %v716 = vand.u32 %v715, 4294901760
        %717 = vmatpush.msra.mxu0 %v716
        %v718 = vand.u32 %v640, 4294901760
        %v719 = vsub.f32 %v640, %v718
        %v720 = vand.u32 %v719, 4294901760
        %v721 = vsub.f32 %v719, %v720
        %v722 = vand.u32 %v721, 4294901760
        %723 = vmatpush.msra.mxu0 %v722
        %v724 = vand.u32 %v639, 4294901760
        %v725 = vsub.f32 %v639, %v724
        %v726 = vand.u32 %v725, 4294901760
        %v727 = vsub.f32 %v725, %v726
        %v728 = vand.u32 %v727, 4294901760
        %729 = vmatpush.msra.mxu0 %v728
        %v730 = vand.u32 %v638, 4294901760
        %v731 = vsub.f32 %v638, %v730
        %v732 = vand.u32 %v731, 4294901760
        %v733 = vsub.f32 %v731, %v732
        %v734 = vand.u32 %v733, 4294901760
        %735 = vmatpush.msra.mxu0 %v734
        %v736 = vand.u32 %v637, 4294901760
        %v737 = vsub.f32 %v637, %v736
        %v738 = vand.u32 %v737, 4294901760
        %v739 = vsub.f32 %v737, %v738
        %v740 = vand.u32 %v739, 4294901760
        %741 = vmatpush.msra.mxu0 %v740
        %v742 = vand.u32 %v651, 4294901760
        %743 = vmatmul.f32.gmra.mxu0 %v742
        %v744 = vpop.f32.mrf.mxu0
        %v745 = vadd.f32 %v684, %v744
        %746 = vdwg.mxu0
        %747 = vmatpush.msra.mxu0 0.0
        %748 = vmatpush.msra.mxu0 0.0
        %749 = vmatpush.msra.mxu0 0.0
        %750 = vmatpush.msra.mxu0 0.0
        %751 = vmatpush.msra.mxu0 0.0
        %752 = vmatpush.msra.mxu0 0.0
        %753 = vmatpush.msra.mxu0 0.0
        %754 = vmatpush.msra.mxu0 0.0
        %v755 = vand.u32 %v644, 4294901760
        %v756 = vsub.f32 %v644, %v755
        %757 = vmatpush.msra.mxu0 %v756
        %v758 = vand.u32 %v643, 4294901760
        %v759 = vsub.f32 %v643, %v758
        %760 = vmatpush.msra.mxu0 %v759
        %v761 = vand.u32 %v642, 4294901760
        %v762 = vsub.f32 %v642, %v761
        %763 = vmatpush.msra.mxu0 %v762
        %v764 = vand.u32 %v641, 4294901760
        %v765 = vsub.f32 %v641, %v764
        %766 = vmatpush.msra.mxu0 %v765
        %v767 = vand.u32 %v640, 4294901760
        %v768 = vsub.f32 %v640, %v767
        %769 = vmatpush.msra.mxu0 %v768
        %v770 = vand.u32 %v639, 4294901760
        %v771 = vsub.f32 %v639, %v770
        %772 = vmatpush.msra.mxu0 %v771
        %v773 = vand.u32 %v638, 4294901760
        %v774 = vsub.f32 %v638, %v773
        %775 = vmatpush.msra.mxu0 %v774
        %v776 = vand.u32 %v637, 4294901760
        %v777 = vsub.f32 %v637, %v776
        %778 = vmatpush.msra.mxu0 %v777
        %v779 = vand.u32 %v651, 4294901760
        %v780 = vsub.f32 %v651, %v779
        %781 = vmatmul.f32.gmra.mxu0 %v780
        %v782 = vpop.f32.mrf.mxu0
        %v783 = vadd.f32 %v745, %v782
        %784 = vdwg.mxu0
        %785 = vmatpush.msra.mxu0 0.0
        %786 = vmatpush.msra.mxu0 0.0
        %787 = vmatpush.msra.mxu0 0.0
        %788 = vmatpush.msra.mxu0 0.0
        %789 = vmatpush.msra.mxu0 0.0
        %790 = vmatpush.msra.mxu0 0.0
        %791 = vmatpush.msra.mxu0 0.0
        %792 = vmatpush.msra.mxu0 0.0
        %v793 = vand.u32 %v644, 4294901760
        %794 = vmatpush.msra.mxu0 %v793
        %v795 = vand.u32 %v643, 4294901760
        %796 = vmatpush.msra.mxu0 %v795
        %v797 = vand.u32 %v642, 4294901760
        %798 = vmatpush.msra.mxu0 %v797
        %v799 = vand.u32 %v641, 4294901760
        %800 = vmatpush.msra.mxu0 %v799
        %v801 = vand.u32 %v640, 4294901760
        %802 = vmatpush.msra.mxu0 %v801
        %v803 = vand.u32 %v639, 4294901760
        %804 = vmatpush.msra.mxu0 %v803
        %v805 = vand.u32 %v638, 4294901760
        %806 = vmatpush.msra.mxu0 %v805
        %v807 = vand.u32 %v637, 4294901760
        %808 = vmatpush.msra.mxu0 %v807
        %v809 = vand.u32 %v651, 4294901760
        %v810 = vsub.f32 %v651, %v809
        %v811 = vand.u32 %v810, 4294901760
        %812 = vmatmul.f32.gmra.mxu0 %v811
        %v813 = vpop.f32.mrf.mxu0
        %v814 = vadd.f32 %v783, %v813
        %815 = vdwg.mxu0
        %816 = vmatpush.msra.mxu0 0.0
        %817 = vmatpush.msra.mxu0 0.0
        %818 = vmatpush.msra.mxu0 0.0
        %819 = vmatpush.msra.mxu0 0.0
        %820 = vmatpush.msra.mxu0 0.0
        %821 = vmatpush.msra.mxu0 0.0
        %822 = vmatpush.msra.mxu0 0.0
        %823 = vmatpush.msra.mxu0 0.0
        %v824 = vand.u32 %v644, 4294901760
        %v825 = vsub.f32 %v644, %v824
        %v826 = vand.u32 %v825, 4294901760
        %827 = vmatpush.msra.mxu0 %v826
        %v828 = vand.u32 %v643, 4294901760
        %v829 = vsub.f32 %v643, %v828
        %v830 = vand.u32 %v829, 4294901760
        %831 = vmatpush.msra.mxu0 %v830
        %v832 = vand.u32 %v642, 4294901760
        %v833 = vsub.f32 %v642, %v832
        %v834 = vand.u32 %v833, 4294901760
        %835 = vmatpush.msra.mxu0 %v834
        %v836 = vand.u32 %v641, 4294901760
        %v837 = vsub.f32 %v641, %v836
        %v838 = vand.u32 %v837, 4294901760
        %839 = vmatpush.msra.mxu0 %v838
        %v840 = vand.u32 %v640, 4294901760
        %v841 = vsub.f32 %v640, %v840
        %v842 = vand.u32 %v841, 4294901760
        %843 = vmatpush.msra.mxu0 %v842
        %v844 = vand.u32 %v639, 4294901760
        %v845 = vsub.f32 %v639, %v844
        %v846 = vand.u32 %v845, 4294901760
        %847 = vmatpush.msra.mxu0 %v846
        %v848 = vand.u32 %v638, 4294901760
        %v849 = vsub.f32 %v638, %v848
        %v850 = vand.u32 %v849, 4294901760
        %851 = vmatpush.msra.mxu0 %v850
        %v852 = vand.u32 %v637, 4294901760
        %v853 = vsub.f32 %v637, %v852
        %v854 = vand.u32 %v853, 4294901760
        %855 = vmatpush.msra.mxu0 %v854
        %v856 = vand.u32 %v651, 4294901760
        %857 = vmatmul.f32.gmra.mxu0 %v856
        %v858 = vpop.f32.mrf.mxu0
        %v859 = vadd.f32 %v814, %v858
        %860 = vdwg.mxu0
        %861 = vmatpush.msra.mxu0 0.0
        %862 = vmatpush.msra.mxu0 0.0
        %863 = vmatpush.msra.mxu0 0.0
        %864 = vmatpush.msra.mxu0 0.0
        %865 = vmatpush.msra.mxu0 0.0
        %866 = vmatpush.msra.mxu0 0.0
        %867 = vmatpush.msra.mxu0 0.0
        %868 = vmatpush.msra.mxu0 0.0
        %v869 = vand.u32 %v644, 4294901760
        %870 = vmatpush.msra.mxu0 %v869
        %v871 = vand.u32 %v643, 4294901760
        %872 = vmatpush.msra.mxu0 %v871
        %v873 = vand.u32 %v642, 4294901760
        %874 = vmatpush.msra.mxu0 %v873
        %v875 = vand.u32 %v641, 4294901760
        %876 = vmatpush.msra.mxu0 %v875
        %v877 = vand.u32 %v640, 4294901760
        %878 = vmatpush.msra.mxu0 %v877
        %v879 = vand.u32 %v639, 4294901760
        %880 = vmatpush.msra.mxu0 %v879
        %v881 = vand.u32 %v638, 4294901760
        %882 = vmatpush.msra.mxu0 %v881
        %v883 = vand.u32 %v637, 4294901760
        %884 = vmatpush.msra.mxu0 %v883
        %v885 = vand.u32 %v651, 4294901760
        %886 = vmatmul.f32.gmra.mxu0 %v885
        %v887 = vpop.f32.mrf.mxu0
        %v888 = vadd.f32 %v859, %v887
        %889 = vdwg.mxu0
        %v890 = vtanh.pop %v888
        %v891 = vld [vmem:[%s5] sm:$0xff]
        %v892 = vld [vmem:[%s5 + $0x8] sm:$0xff]
        %v893 = vld [vmem:[%s5 + $0x10] sm:$0xff]
        %v894 = vld [vmem:[%s5 + $0x18] sm:$0xff]
        %v895 = vld [vmem:[%s5 + $0x20] sm:$0xff]
        %v896 = vld [vmem:[%s5 + $0x28] sm:$0xff]
        %v897 = vld [vmem:[%s5 + $0x30] sm:$0xff]
        %v898 = vld [vmem:[%s5 + $0x38] sm:$0xff]
        %v899 = vld [vmem:[%s6] sm:$0x1]
        %v901 = vperm.slane %v899, 0
        %v904 = vsel %vm649, %v890, 0
        %906 = vmatpush.msra.mxu0 0.0
        %907 = vmatpush.msra.mxu0 0.0
        %908 = vmatpush.msra.mxu0 0.0
        %909 = vmatpush.msra.mxu0 0.0
        %910 = vmatpush.msra.mxu0 0.0
        %911 = vmatpush.msra.mxu0 0.0
        %912 = vmatpush.msra.mxu0 0.0
        %913 = vmatpush.msra.mxu0 0.0
        %v914 = vand.u32 %v898, 4294901760
        %915 = vmatpush.msra.mxu0 %v914
        %v916 = vand.u32 %v897, 4294901760
        %917 = vmatpush.msra.mxu0 %v916
        %v918 = vand.u32 %v896, 4294901760
        %919 = vmatpush.msra.mxu0 %v918
        %v920 = vand.u32 %v895, 4294901760
        %921 = vmatpush.msra.mxu0 %v920
        %v922 = vand.u32 %v894, 4294901760
        %923 = vmatpush.msra.mxu0 %v922
        %v924 = vand.u32 %v893, 4294901760
        %925 = vmatpush.msra.mxu0 %v924
        %v926 = vand.u32 %v892, 4294901760
        %927 = vmatpush.msra.mxu0 %v926
        %v928 = vand.u32 %v891, 4294901760
        %929 = vmatpush.msra.mxu0 %v928
        %v930 = vand.u32 %v904, 4294901760
        %v931 = vsub.f32 %v904, %v930
        %v932 = vand.u32 %v931, 4294901760
        %v933 = vsub.f32 %v931, %v932
        %v934 = vand.u32 %v933, 4294901760
        %935 = vmatmul.f32.gmra.mxu0 %v934
        %v936 = vpop.f32.mrf.mxu0
        %v937 = vadd.f32 %v901, %v936
        %938 = vdwg.mxu0
        %939 = vmatpush.msra.mxu0 0.0
        %940 = vmatpush.msra.mxu0 0.0
        %941 = vmatpush.msra.mxu0 0.0
        %942 = vmatpush.msra.mxu0 0.0
        %943 = vmatpush.msra.mxu0 0.0
        %944 = vmatpush.msra.mxu0 0.0
        %945 = vmatpush.msra.mxu0 0.0
        %946 = vmatpush.msra.mxu0 0.0
        %v947 = vand.u32 %v898, 4294901760
        %v948 = vsub.f32 %v898, %v947
        %v949 = vand.u32 %v948, 4294901760
        %v950 = vsub.f32 %v948, %v949
        %v951 = vand.u32 %v950, 4294901760
        %952 = vmatpush.msra.mxu0 %v951
        %v953 = vand.u32 %v897, 4294901760
        %v954 = vsub.f32 %v897, %v953
        %v955 = vand.u32 %v954, 4294901760
        %v956 = vsub.f32 %v954, %v955
        %v957 = vand.u32 %v956, 4294901760
        %958 = vmatpush.msra.mxu0 %v957
        %v959 = vand.u32 %v896, 4294901760
        %v960 = vsub.f32 %v896, %v959
        %v961 = vand.u32 %v960, 4294901760
        %v962 = vsub.f32 %v960, %v961
        %v963 = vand.u32 %v962, 4294901760
        %964 = vmatpush.msra.mxu0 %v963
        %v965 = vand.u32 %v895, 4294901760
        %v966 = vsub.f32 %v895, %v965
        %v967 = vand.u32 %v966, 4294901760
        %v968 = vsub.f32 %v966, %v967
        %v969 = vand.u32 %v968, 4294901760
        %970 = vmatpush.msra.mxu0 %v969
        %v971 = vand.u32 %v894, 4294901760
        %v972 = vsub.f32 %v894, %v971
        %v973 = vand.u32 %v972, 4294901760
        %v974 = vsub.f32 %v972, %v973
        %v975 = vand.u32 %v974, 4294901760
        %976 = vmatpush.msra.mxu0 %v975
        %v977 = vand.u32 %v893, 4294901760
        %v978 = vsub.f32 %v893, %v977
        %v979 = vand.u32 %v978, 4294901760
        %v980 = vsub.f32 %v978, %v979
        %v981 = vand.u32 %v980, 4294901760
        %982 = vmatpush.msra.mxu0 %v981
        %v983 = vand.u32 %v892, 4294901760
        %v984 = vsub.f32 %v892, %v983
        %v985 = vand.u32 %v984, 4294901760
        %v986 = vsub.f32 %v984, %v985
        %v987 = vand.u32 %v986, 4294901760
        %988 = vmatpush.msra.mxu0 %v987
        %v989 = vand.u32 %v891, 4294901760
        %v990 = vsub.f32 %v891, %v989
        %v991 = vand.u32 %v990, 4294901760
        %v992 = vsub.f32 %v990, %v991
        %v993 = vand.u32 %v992, 4294901760
        %994 = vmatpush.msra.mxu0 %v993
        %v995 = vand.u32 %v904, 4294901760
        %996 = vmatmul.f32.gmra.mxu0 %v995
        %v997 = vpop.f32.mrf.mxu0
        %v998 = vadd.f32 %v937, %v997
        %999 = vdwg.mxu0
        %1000 = vmatpush.msra.mxu0 0.0
        %1001 = vmatpush.msra.mxu0 0.0
        %1002 = vmatpush.msra.mxu0 0.0
        %1003 = vmatpush.msra.mxu0 0.0
        %1004 = vmatpush.msra.mxu0 0.0
        %1005 = vmatpush.msra.mxu0 0.0
        %1006 = vmatpush.msra.mxu0 0.0
        %1007 = vmatpush.msra.mxu0 0.0
        %v1008 = vand.u32 %v898, 4294901760
        %v1009 = vsub.f32 %v898, %v1008
        %1010 = vmatpush.msra.mxu0 %v1009
        %v1011 = vand.u32 %v897, 4294901760
        %v1012 = vsub.f32 %v897, %v1011
        %1013 = vmatpush.msra.mxu0 %v1012
        %v1014 = vand.u32 %v896, 4294901760
        %v1015 = vsub.f32 %v896, %v1014
        %1016 = vmatpush.msra.mxu0 %v1015
        %v1017 = vand.u32 %v895, 4294901760
        %v1018 = vsub.f32 %v895, %v1017
        %1019 = vmatpush.msra.mxu0 %v1018
        %v1020 = vand.u32 %v894, 4294901760
        %v1021 = vsub.f32 %v894, %v1020
        %1022 = vmatpush.msra.mxu0 %v1021
        %v1023 = vand.u32 %v893, 4294901760
        %v1024 = vsub.f32 %v893, %v1023
        %1025 = vmatpush.msra.mxu0 %v1024
        %v1026 = vand.u32 %v892, 4294901760
        %v1027 = vsub.f32 %v892, %v1026
        %1028 = vmatpush.msra.mxu0 %v1027
        %v1029 = vand.u32 %v891, 4294901760
        %v1030 = vsub.f32 %v891, %v1029
        %1031 = vmatpush.msra.mxu0 %v1030
        %v1032 = vand.u32 %v904, 4294901760
        %v1033 = vsub.f32 %v904, %v1032
        %1034 = vmatmul.f32.gmra.mxu0 %v1033
        %v1035 = vpop.f32.mrf.mxu0
        %v1036 = vadd.f32 %v998, %v1035
        %1037 = vdwg.mxu0
        %1038 = vmatpush.msra.mxu0 0.0
        %1039 = vmatpush.msra.mxu0 0.0
        %1040 = vmatpush.msra.mxu0 0.0
        %1041 = vmatpush.msra.mxu0 0.0
        %1042 = vmatpush.msra.mxu0 0.0
        %1043 = vmatpush.msra.mxu0 0.0
        %1044 = vmatpush.msra.mxu0 0.0
        %1045 = vmatpush.msra.mxu0 0.0
        %v1046 = vand.u32 %v898, 4294901760
        %1047 = vmatpush.msra.mxu0 %v1046
        %v1048 = vand.u32 %v897, 4294901760
        %1049 = vmatpush.msra.mxu0 %v1048
        %v1050 = vand.u32 %v896, 4294901760
        %1051 = vmatpush.msra.mxu0 %v1050
        %v1052 = vand.u32 %v895, 4294901760
        %1053 = vmatpush.msra.mxu0 %v1052
        %v1054 = vand.u32 %v894, 4294901760
        %1055 = vmatpush.msra.mxu0 %v1054
        %v1056 = vand.u32 %v893, 4294901760
        %1057 = vmatpush.msra.mxu0 %v1056
        %v1058 = vand.u32 %v892, 4294901760
        %1059 = vmatpush.msra.mxu0 %v1058
        %v1060 = vand.u32 %v891, 4294901760
        %1061 = vmatpush.msra.mxu0 %v1060
        %v1062 = vand.u32 %v904, 4294901760
        %v1063 = vsub.f32 %v904, %v1062
        %v1064 = vand.u32 %v1063, 4294901760
        %1065 = vmatmul.f32.gmra.mxu0 %v1064
        %v1066 = vpop.f32.mrf.mxu0
        %v1067 = vadd.f32 %v1036, %v1066
        %1068 = vdwg.mxu0
        %1069 = vmatpush.msra.mxu0 0.0
        %1070 = vmatpush.msra.mxu0 0.0
        %1071 = vmatpush.msra.mxu0 0.0
        %1072 = vmatpush.msra.mxu0 0.0
        %1073 = vmatpush.msra.mxu0 0.0
        %1074 = vmatpush.msra.mxu0 0.0
        %1075 = vmatpush.msra.mxu0 0.0
        %1076 = vmatpush.msra.mxu0 0.0
        %v1077 = vand.u32 %v898, 4294901760
        %v1078 = vsub.f32 %v898, %v1077
        %v1079 = vand.u32 %v1078, 4294901760
        %1080 = vmatpush.msra.mxu0 %v1079
        %v1081 = vand.u32 %v897, 4294901760
        %v1082 = vsub.f32 %v897, %v1081
        %v1083 = vand.u32 %v1082, 4294901760
        %1084 = vmatpush.msra.mxu0 %v1083
        %v1085 = vand.u32 %v896, 4294901760
        %v1086 = vsub.f32 %v896, %v1085
        %v1087 = vand.u32 %v1086, 4294901760
        %1088 = vmatpush.msra.mxu0 %v1087
        %v1089 = vand.u32 %v895, 4294901760
        %v1090 = vsub.f32 %v895, %v1089
        %v1091 = vand.u32 %v1090, 4294901760
        %1092 = vmatpush.msra.mxu0 %v1091
        %v1093 = vand.u32 %v894, 4294901760
        %v1094 = vsub.f32 %v894, %v1093
        %v1095 = vand.u32 %v1094, 4294901760
        %1096 = vmatpush.msra.mxu0 %v1095
        %v1097 = vand.u32 %v893, 4294901760
        %v1098 = vsub.f32 %v893, %v1097
        %v1099 = vand.u32 %v1098, 4294901760
        %1100 = vmatpush.msra.mxu0 %v1099
        %v1101 = vand.u32 %v892, 4294901760
        %v1102 = vsub.f32 %v892, %v1101
        %v1103 = vand.u32 %v1102, 4294901760
        %1104 = vmatpush.msra.mxu0 %v1103
        %v1105 = vand.u32 %v891, 4294901760
        %v1106 = vsub.f32 %v891, %v1105
        %v1107 = vand.u32 %v1106, 4294901760
        %1108 = vmatpush.msra.mxu0 %v1107
        %v1109 = vand.u32 %v904, 4294901760
        %1110 = vmatmul.f32.gmra.mxu0 %v1109
        %v1111 = vpop.f32.mrf.mxu0
        %v1112 = vadd.f32 %v1067, %v1111
        %1113 = vdwg.mxu0
        %1114 = vmatpush.msra.mxu0 0.0
        %1115 = vmatpush.msra.mxu0 0.0
        %1116 = vmatpush.msra.mxu0 0.0
        %1117 = vmatpush.msra.mxu0 0.0
        %1118 = vmatpush.msra.mxu0 0.0
        %1119 = vmatpush.msra.mxu0 0.0
        %1120 = vmatpush.msra.mxu0 0.0
        %1121 = vmatpush.msra.mxu0 0.0
        %v1122 = vand.u32 %v898, 4294901760
        %1123 = vmatpush.msra.mxu0 %v1122
        %v1124 = vand.u32 %v897, 4294901760
        %1125 = vmatpush.msra.mxu0 %v1124
        %v1126 = vand.u32 %v896, 4294901760
        %1127 = vmatpush.msra.mxu0 %v1126
        %v1128 = vand.u32 %v895, 4294901760
        %1129 = vmatpush.msra.mxu0 %v1128
        %v1130 = vand.u32 %v894, 4294901760
        %1131 = vmatpush.msra.mxu0 %v1130
        %v1132 = vand.u32 %v893, 4294901760
        %1133 = vmatpush.msra.mxu0 %v1132
        %v1134 = vand.u32 %v892, 4294901760
        %1135 = vmatpush.msra.mxu0 %v1134
        %v1136 = vand.u32 %v891, 4294901760
        %1137 = vmatpush.msra.mxu0 %v1136
        %v1138 = vand.u32 %v904, 4294901760
        %1139 = vmatmul.f32.gmra.mxu0 %v1138
        %v1140 = vpop.f32.mrf.mxu0
        %v1141 = vadd.f32 %v1112, %v1140
        %1142 = vdwg.mxu0
        %1143 = vst [vmem:[%s269] sm:$0xff] %v1141
        %s1144 = sand.u32 %s181, 1
        %s1145 = scalar_lea.sflag [#allocation3], %s1144
        %s1146 = sand.u32 %s181, 1
        %s1147 = smul.addr %s1146, 8
        %s1148 = scalar_lea.vmem [#allocation2], %s1147
        // Predicated region
        $region49: #{tpu_custom_call.1} parent=47 // pred_check
          %p1149 = pneg %p191
        $region50: #{tpu_custom_call.1} parent=47 // pred_check_branch
          %1151 = sbr.rel (%p1149) target = $region52
        $region51: #{tpu_custom_call.1} parent=47 // pred_region
          %1153 = vsyncadd %s1145, 0
          %s1154 = smul.addr %s21, 8
          %s1155 = scalar_lea.hbm %s7, %s1154
          %s1157 = sshll.u32 %s1148, 4
          %s1158 = int_to_ptr.vmem [resolvable:$true] %s1157
          %s1159 = sshll.u32 %s1155, 4
          %s1160 = int_to_ptr.hbm [resolvable:$true] %s1159
          %1162 = dma.vmem_to_hbm [thread:$0]  %s1158, 128, %s1160, %s1145
        $region52: #{tpu_custom_call.1} parent=47 // pred_fallthru
          _
      $region48: #{tpu_custom_call.1} parent=5 // pred_fallthru
        _
      %p1163 = scmp.le.s32.totalorder 2, %s16
      // Predicated region
      $region53: #{tpu_custom_call.1} parent=5 // pred_check
        %p1164 = pneg %p1163
      $region54: #{tpu_custom_call.1} parent=5 // pred_check_branch
        %1166 = sbr.rel (%p1164) target = $region56
      $region55: #{tpu_custom_call.1} parent=5 // pred_region
        %s1167 = ssub.s32 %s16, 2
        // Predicated region
        $region57: #{tpu_custom_call.1} parent=55 // pred_check
          %p1168 = pneg %p197
        $region58: #{tpu_custom_call.1} parent=55 // pred_check_branch
          %1170 = sbr.rel (%p1168) target = $region60
        $region59: #{tpu_custom_call.1} parent=55 // pred_region
          %s1171 = sand.u32 %s182, 1
          %s1172 = scalar_lea.sflag [#allocation3], %s1171
          %s1173 = sand.u32 %s182, 1
          %s1174 = smul.addr %s1173, 8
          %s1175 = scalar_lea.vmem [#allocation2], %s1174
          %1177 = dma.done %s1172, 128
        $region60: #{tpu_custom_call.1} parent=55 // pred_fallthru
          _
      $region56: #{tpu_custom_call.1} parent=5 // pred_fallthru
        _
    $region6: #{tpu_custom_call.1} parent=1 // loop_footer
      %s20 = sadd.s32 1, %s16
    $region7: #{tpu_custom_call.1} parent=1 // loop_footer_branch
      %15 = sbr.rel target = $region3
    $region8: #{tpu_custom_call.1} parent=1 // loop_exit
      _
    %1178 = vsyncpa [#allocation3], 1
    %s1179 = scalar_lea.sflag [#allocation3], 1
    %1180 = vsyncpa %s1179, 1

</llo_original>
